<compile_context>
chip_gen: v7x
topology: tpu7x:2x2x1
jax: 0.10.0
libtpu: 0.0.40
codegen_flags: <defaults>
</compile_context>

<pallas_src>
import jax
import jax.numpy as jnp
from jax.experimental import pallas as pl
from jax.experimental.pallas import tpu as pltpu


def _conv1x1_kernel(w_ref, b_ref, x_ref, o_ref):
    # w_ref: (Cout, Cin), b_ref: (Cout, 1), x_ref: (Cin, tile_hw),
    # o_ref: (Cout, tile_hw)
    acc = jnp.dot(w_ref[...], x_ref[...], preferred_element_type=jnp.float32)
    o_ref[...] = (acc + b_ref[...]).astype(o_ref.dtype)


def conv2d_1x1(x_nchw, weight_oihw, bias, *, max_tile_hw=2048):
    """Equivalent of nn.Conv2d(Cin, Cout, kernel_size=1, stride=1) on NCHW input."""
    n, cin, h, w = x_nchw.shape
    cout = weight_oihw.shape[0]
    hw = h * w

    # Free reshapes only (merge trailing dims) -- no HBM relayout passes.
    x_chw = x_nchw.reshape(n, cin, hw)        # (N, Cin, HW)
    w_ck = weight_oihw.reshape(cout, cin)     # (Cout, Cin)
    b_c1 = bias.reshape(cout, 1)              # (Cout, 1)

    # HW tile: either the full (possibly non-128-multiple) HW axis in one tile,
    # or a lane-aligned tile marching over HW with a clamped ragged tail.
    if hw <= max_tile_hw:
        tile_hw = hw
    else:
        tile_hw = max(128, (max_tile_hw // 128) * 128)

    grid = (n, pl.cdiv(hw, tile_hw))

    out = pl.pallas_call(
        _conv1x1_kernel,
        out_shape=jax.ShapeDtypeStruct((n, cout, hw), x_nchw.dtype),
        grid=grid,
        in_specs=[
            pl.BlockSpec((cout, cin), lambda i, j: (0, 0)),               # weight: resident
            pl.BlockSpec((cout, 1), lambda i, j: (0, 0)),                 # bias:   resident
            pl.BlockSpec((None, cin, tile_hw), lambda i, j: (i, 0, j)),   # x tile over (N, HW)
        ],
        out_specs=pl.BlockSpec((None, cout, tile_hw), lambda i, j: (i, 0, j)),
        compiler_params=pltpu.CompilerParams(
            dimension_semantics=("parallel", "parallel"),   # shard N / HW tiles across TCs
        ),
    )(w_ck, b_c1, x_chw)

    return out.reshape(n, cout, h, w)


def _reference(x, weight, bias):
    cout = weight.shape[0]
    return (jnp.einsum("nchw,oc->nohw", x, weight.reshape(cout, -1))
            + bias.reshape(1, cout, 1, 1))


if __name__ == "__main__":
    key = jax.random.PRNGKey(0)
    kx, kw, kb, kx2, kx3 = jax.random.split(key, 5)

    CIN, COUT = 480, 20

    # Deterministic parameter init (Conv2d(480, 20, 1) shapes).
    fan_in = CIN  # kernel is 1x1
    bound = 1.0 / (fan_in ** 0.5)
    weight = jax.random.uniform(kw, (COUT, CIN, 1, 1), minval=-bound, maxval=bound,
                                dtype=jnp.float32)
    bias = jax.random.uniform(kb, (COUT,), minval=-bound, maxval=bound,
                              dtype=jnp.float32)

    # Case 1: exact module shape [1, 480, 1, 1] (single tiny tile, grid (1,1)).
    x = jax.random.normal(kx, (1, CIN, 1, 1), dtype=jnp.float32)
    out = conv2d_1x1(x, weight, bias)
    jax.block_until_ready(out)
    ref = _reference(x, weight, bias)
    assert out.shape == (1, COUT, 1, 1)
    assert jnp.allclose(out, ref, atol=1e-4, rtol=1e-4)

    # Case 2: multi-tile, evenly divisible HW (N=2, 16x16 -> HW=256, 2 tiles/batch).
    x2 = jax.random.normal(kx2, (2, CIN, 16, 16), dtype=jnp.float32)
    out2 = conv2d_1x1(x2, weight, bias, max_tile_hw=128)
    jax.block_until_ready(out2)
    ref2 = _reference(x2, weight, bias)
    assert out2.shape == (2, COUT, 16, 16)
    assert jnp.allclose(out2, ref2, atol=1e-4, rtol=1e-4)

    # Case 3: ragged last HW tile (13x13 = 169, tile 128 -> 2 tiles, second partial).
    x3 = jax.random.normal(kx3, (1, CIN, 13, 13), dtype=jnp.float32)
    out3 = conv2d_1x1(x3, weight, bias, max_tile_hw=128)
    jax.block_until_ready(out3)
    ref3 = _reference(x3, weight, bias)
    assert out3.shape == (1, COUT, 13, 13)
    assert jnp.allclose(out3, ref3, atol=1e-4, rtol=1e-4)

    print("KERNEL_OK")
</pallas_src>

<mosaic_0001>
module attributes {stable_mosaic.version = 11 : i64} {
  func.func @_conv1x1_kernel(%arg0: i32, %arg1: i32, %arg2: memref<20x480xf32, #tpu.memory_space<vmem>>, %arg3: memref<20x1xf32, #tpu.memory_space<vmem>>, %arg4: memref<1x480x1xf32, #tpu.memory_space<vmem>>, %arg5: memref<1x20x1xf32, #tpu.memory_space<vmem>>) attributes {dimension_semantics = [#tpu.dimension_semantics<parallel>, #tpu.dimension_semantics<parallel>], iteration_bounds = array<i64: 1, 1>, scalar_prefetch = 0 : i64, scratch_operands = 0 : i64, tpu.core_type = #tpu.core_type<tc>, window_params = [{pipeline_mode = #tpu.pipeline_mode<synchronous>, transform_indices = @transform_0, window_bounds = array<i64: 20, 480>}, {pipeline_mode = #tpu.pipeline_mode<synchronous>, transform_indices = @transform_1, window_bounds = array<i64: 20, 1>}, {transform_indices = @transform_2, window_bounds = array<i64: 1, 480, 1>}, {transform_indices = @transform_3, window_bounds = array<i64: 1, 20, 1>}]} {
    %c0 = arith.constant 0 : index
    %c0_0 = arith.constant 0 : index
    %0 = vector.load %arg2[%c0, %c0_0] : memref<20x480xf32, #tpu.memory_space<vmem>>, vector<20x480xf32>
    %c0_1 = arith.constant 0 : index
    %c0_2 = arith.constant 0 : index
    %c0_3 = arith.constant 0 : index
    %1 = vector.load %arg4[%c0_1, %c0_2, %c0_3] : memref<1x480x1xf32, #tpu.memory_space<vmem>>, vector<1x480x1xf32>
    %2 = vector.shape_cast %1 : vector<1x480x1xf32> to vector<480x1xf32>
    %cst = arith.constant dense<0.000000e+00> : vector<20x1xf32>
    %3 = tpu.matmul %0, %2, %cst {dimension_numbers = #tpu.dot_dimension_numbers<[1], [0], [0], [1], [0, 0, 1, 1], [], []>} : vector<20x480xf32>, vector<480x1xf32>, vector<20x1xf32> -> vector<20x1xf32>
    %c0_4 = arith.constant 0 : index
    %c0_5 = arith.constant 0 : index
    %4 = vector.load %arg3[%c0_4, %c0_5] : memref<20x1xf32, #tpu.memory_space<vmem>>, vector<20x1xf32>
    %5 = arith.addf %3, %4 : vector<20x1xf32>
    %c0_6 = arith.constant 0 : index
    %c0_7 = arith.constant 0 : index
    %c0_8 = arith.constant 0 : index
    %6 = vector.load %arg5[%c0_6, %c0_7, %c0_8] : memref<1x20x1xf32, #tpu.memory_space<vmem>>, vector<1x20x1xf32>
    %7 = vector.shape_cast %6 : vector<1x20x1xf32> to vector<20x1xf32>
    %8 = vector.shape_cast %5 : vector<20x1xf32> to vector<1x20x1xf32>
    tpu.vector_store %arg5[%c0_6, %c0_7, %c0_8], %8 {strides = array<i32>} : memref<1x20x1xf32, #tpu.memory_space<vmem>>, vector<1x20x1xf32>,
    return
  }
  func.func @transform_0(%arg0: i32, %arg1: i32) -> (i32, i32) {
    %c0_i32 = arith.constant 0 : i32
    %c0_i32_0 = arith.constant 0 : i32
    %c0_i32_1 = arith.constant 0 : i32
    return %c0_i32, %c0_i32_0 : i32, i32
  }
  func.func @transform_1(%arg0: i32, %arg1: i32) -> (i32, i32) {
    %c0_i32 = arith.constant 0 : i32
    %c0_i32_0 = arith.constant 0 : i32
    %c0_i32_1 = arith.constant 0 : i32
    return %c0_i32, %c0_i32_0 : i32, i32
  }
  func.func @transform_2(%arg0: i32, %arg1: i32) -> (i32, i32, i32) {
    %c0_i32 = arith.constant 0 : i32
    %c0_i32_0 = arith.constant 0 : i32
    return %arg0, %c0_i32, %arg1 : i32, i32, i32
  }
  func.func @transform_3(%arg0: i32, %arg1: i32) -> (i32, i32, i32) {
    %c0_i32 = arith.constant 0 : i32
    %c0_i32_0 = arith.constant 0 : i32
    return %arg0, %c0_i32, %arg1 : i32, i32, i32
  }
}

</mosaic_0001>

<llo_original>
// kernel: tpu_custom_call.1
$region0: #{tpu_custom_call.1}
  #allocation0 [shape = 'u32[]', space=smem, size = 0x4, offset = 0x4, fixed_abs, tag = 'smem constant byte address 0x4 - core index']
  #allocation1 [shape = 'u32[144,128]{1,0:T(1,128)}', space=vmem, size = 0x12000, scoped, tag = 'internal scratch']
  %s0 = inlined_call_operand.vmem [shape: f32[20,480], index: 0, kind: input, shape index: {}]
  %s1 = inlined_call_operand.vmem [shape: f32[20,1], index: 1, kind: input, shape index: {}]
  %s2 = inlined_call_operand.vmem [shape: f32[1,480,1], index: 2, kind: input, shape index: {}]
  %s3 = inlined_call_operand.vmem [shape: f32[1,20,1], index: 3, kind: output, shape index: {}]
  %s4 = sld [smem:[#allocation0]]
  $region22: #{tpu_custom_call.1} parent=0
    _
  %s6 = ssub.s32 1, %s4
  %s7 = scalar_select 0, %s6, %s4
  // Predicated region
  $region2: #{tpu_custom_call.1} parent=0 // pred_check
    _
  $region3: #{tpu_custom_call.1} parent=0 // pred_check_branch
    %9 = sbr.rel (0) target = $region5
  $region4: #{tpu_custom_call.1} parent=0 // pred_region
    _
  $region5: #{tpu_custom_call.1} parent=0 // pred_fallthru
    _
  // Predicated region
  $region6: #{tpu_custom_call.1} parent=0 // pred_check
    _
  $region7: #{tpu_custom_call.1} parent=0 // pred_check_branch
    %11 = sbr.rel (0) target = $region9
  $region8: #{tpu_custom_call.1} parent=0 // pred_region
    _
  $region9: #{tpu_custom_call.1} parent=0 // pred_fallthru
    _
  // Predicated region
  $region10: #{tpu_custom_call.1} parent=0 // pred_check
    _
  $region11: #{tpu_custom_call.1} parent=0 // pred_check_branch
    %13 = sbr.rel (0) target = $region13
  $region12: #{tpu_custom_call.1} parent=0 // pred_region
    _
  $region13: #{tpu_custom_call.1} parent=0 // pred_fallthru
    _
  %v14 = vld [vmem:[%s0] sm:$0xff]
  %v15 = vld [vmem:[%s0 + $0x8] sm:$0xff]
  %v16 = vld [vmem:[%s0 + $0x10] sm:$0xff]
  %v17 = vld [vmem:[%s0 + $0x18] sm:$0xff]
  %v18 = vld [vmem:[%s0 + $0x20] sm:$0xff]
  %v19 = vld [vmem:[%s0 + $0x28] sm:$0xff]
  %v20 = vld [vmem:[%s0 + $0x30] sm:$0xff]
  %v21 = vld [vmem:[%s0 + $0x38] sm:$0xff]
  %v22 = vld [vmem:[%s0 + $0x40] sm:$0xf]
  %v23 = vld [vmem:[%s0 + $0x48] sm:$0xf]
  %v24 = vld [vmem:[%s0 + $0x50] sm:$0xf]
  %v25 = vld [vmem:[%s0 + $0x58] sm:$0xf]
  %v26 = vld [vmem:[%s2] sm:$0xff]
  %v27 = vld [vmem:[%s2 + $0x8] sm:$0xff]
  %v28 = vld [vmem:[%s2 + $0x10] sm:$0xff]
  %v29 = vld [vmem:[%s2 + $0x18] sm:$0xff]
  %v30 = vld [vmem:[%s2 + $0x20] sm:$0xff]
  %v31 = vld [vmem:[%s2 + $0x28] sm:$0xff]
  %v32 = vld [vmem:[%s2 + $0x30] sm:$0xff]
  %v33 = vld [vmem:[%s2 + $0x38] sm:$0xff]
  %v34 = vld [vmem:[%s2 + $0x40] sm:$0xff]
  %v35 = vld [vmem:[%s2 + $0x48] sm:$0xff]
  %v36 = vld [vmem:[%s2 + $0x50] sm:$0xff]
  %v37 = vld [vmem:[%s2 + $0x58] sm:$0xff]
  %v38 = vld [vmem:[%s2 + $0x60] sm:$0xff]
  %v39 = vld [vmem:[%s2 + $0x68] sm:$0xff]
  %v40 = vld [vmem:[%s2 + $0x70] sm:$0xff]
  %v41 = vld [vmem:[%s2 + $0x78] sm:$0xff]
  %v42 = vld [vmem:[%s2 + $0x80] sm:$0xff]
  %v43 = vld [vmem:[%s2 + $0x88] sm:$0xff]
  %v44 = vld [vmem:[%s2 + $0x90] sm:$0xff]
  %v45 = vld [vmem:[%s2 + $0x98] sm:$0xff]
  %v46 = vld [vmem:[%s2 + $0xa0] sm:$0xff]
  %v47 = vld [vmem:[%s2 + $0xa8] sm:$0xff]
  %v48 = vld [vmem:[%s2 + $0xb0] sm:$0xff]
  %v49 = vld [vmem:[%s2 + $0xb8] sm:$0xff]
  %v50 = vld [vmem:[%s2 + $0xc0] sm:$0xff]
  %v51 = vld [vmem:[%s2 + $0xc8] sm:$0xff]
  %v52 = vld [vmem:[%s2 + $0xd0] sm:$0xff]
  %v53 = vld [vmem:[%s2 + $0xd8] sm:$0xff]
  %v54 = vld [vmem:[%s2 + $0xe0] sm:$0xff]
  %v55 = vld [vmem:[%s2 + $0xe8] sm:$0xff]
  %v56 = vld [vmem:[%s2 + $0xf0] sm:$0xff]
  %v57 = vld [vmem:[%s2 + $0xf8] sm:$0xff]
  %v58 = vld [vmem:[%s2 + $0x100] sm:$0xff]
  %v59 = vld [vmem:[%s2 + $0x108] sm:$0xff]
  %v60 = vld [vmem:[%s2 + $0x110] sm:$0xff]
  %v61 = vld [vmem:[%s2 + $0x118] sm:$0xff]
  %v62 = vld [vmem:[%s2 + $0x120] sm:$0xff]
  %v63 = vld [vmem:[%s2 + $0x128] sm:$0xff]
  %v64 = vld [vmem:[%s2 + $0x130] sm:$0xff]
  %v65 = vld [vmem:[%s2 + $0x138] sm:$0xff]
  %v66 = vld [vmem:[%s2 + $0x140] sm:$0xff]
  %v67 = vld [vmem:[%s2 + $0x148] sm:$0xff]
  %v68 = vld [vmem:[%s2 + $0x150] sm:$0xff]
  %v69 = vld [vmem:[%s2 + $0x158] sm:$0xff]
  %v70 = vld [vmem:[%s2 + $0x160] sm:$0xff]
  %v71 = vld [vmem:[%s2 + $0x168] sm:$0xff]
  %v72 = vld [vmem:[%s2 + $0x170] sm:$0xff]
  %v73 = vld [vmem:[%s2 + $0x178] sm:$0xff]
  %v74 = vld [vmem:[%s2 + $0x180] sm:$0xff]
  %v75 = vld [vmem:[%s2 + $0x188] sm:$0xff]
  %v76 = vld [vmem:[%s2 + $0x190] sm:$0xff]
  %v77 = vld [vmem:[%s2 + $0x198] sm:$0xff]
  %v78 = vld [vmem:[%s2 + $0x1a0] sm:$0xff]
  %v79 = vld [vmem:[%s2 + $0x1a8] sm:$0xff]
  %v80 = vld [vmem:[%s2 + $0x1b0] sm:$0xff]
  %v81 = vld [vmem:[%s2 + $0x1b8] sm:$0xff]
  %v82 = vld [vmem:[%s2 + $0x1c0] sm:$0xff]
  %v83 = vld [vmem:[%s2 + $0x1c8] sm:$0xff]
  %v84 = vld [vmem:[%s2 + $0x1d0] sm:$0xff]
  %v85 = vld [vmem:[%s2 + $0x1d8] sm:$0xff]
  %v86 = vld [vmem:[%s1] sm:$0xff]
  %v87 = vld [vmem:[%s1 + $0x8] sm:$0xff]
  %v88 = vld [vmem:[%s1 + $0x10] sm:$0xf]
  %vm89 = vcmask 785408
  %v91 = vsel %vm89, %v17, 0
  %v94 = vsel %vm89, %v21, 0
  %v97 = vsel %vm89, %v25, 0
  %99 = vmatprep.subr.mxu0 0.0
  %100 = vmatpush1.msra.mxu0 %v26
  %101 = vmatprep.subr.mxu0 0.0
  %102 = vmatpush1.msra.mxu0 %v27
  %103 = vmatprep.subr.mxu0 0.0
  %104 = vmatpush1.msra.mxu0 %v28
  %105 = vmatprep.subr.mxu0 0.0
  %106 = vmatpush1.msra.mxu0 %v29
  %107 = vmatprep.subr.mxu0 0.0
  %108 = vmatpush1.msra.mxu0 %v30
  %109 = vmatprep.subr.mxu0 0.0
  %110 = vmatpush1.msra.mxu0 %v31
  %111 = vmatprep.subr.mxu0 0.0
  %112 = vmatpush1.msra.mxu0 %v32
  %113 = vmatprep.subr.mxu0 0.0
  %114 = vmatpush1.msra.mxu0 %v33
  %115 = vmatprep.subr.mxu0 0.0
  %116 = vmatpush1.msra.mxu0 %v34
  %117 = vmatprep.subr.mxu0 0.0
  %118 = vmatpush1.msra.mxu0 %v35
  %119 = vmatprep.subr.mxu0 0.0
  %120 = vmatpush1.msra.mxu0 %v36
  %121 = vmatprep.subr.mxu0 0.0
  %122 = vmatpush1.msra.mxu0 %v37
  %123 = vmatprep.subr.mxu0 0.0
  %124 = vmatpush1.msra.mxu0 %v38
  %125 = vmatprep.subr.mxu0 0.0
  %126 = vmatpush1.msra.mxu0 %v39
  %127 = vmatprep.subr.mxu0 0.0
  %128 = vmatpush1.msra.mxu0 %v40
  %129 = vmatprep.subr.mxu0 0.0
  %130 = vmatpush1.msra.mxu0 %v41
  %131 = vmatprep.subr.mxu0 0.0
  %132 = vmatpush1.msra.mxu0 %v42
  %133 = vmatprep.subr.mxu0 0.0
  %134 = vmatpush1.msra.mxu0 %v43
  %135 = vmatprep.subr.mxu0 0.0
  %136 = vmatpush1.msra.mxu0 %v44
  %137 = vmatprep.subr.mxu0 0.0
  %138 = vmatpush1.msra.mxu0 %v45
  %139 = vmatprep.subr.mxu0 0.0
  %140 = vmatpush1.msra.mxu0 %v46
  %141 = vmatprep.subr.mxu0 0.0
  %142 = vmatpush1.msra.mxu0 %v47
  %143 = vmatprep.subr.mxu0 0.0
  %144 = vmatpush1.msra.mxu0 %v48
  %145 = vmatprep.subr.mxu0 0.0
  %146 = vmatpush1.msra.mxu0 %v49
  %147 = vmatprep.subr.mxu0 0.0
  %148 = vmatpush1.msra.mxu0 %v50
  %149 = vmatprep.subr.mxu0 0.0
  %150 = vmatpush1.msra.mxu0 %v51
  %151 = vmatprep.subr.mxu0 0.0
  %152 = vmatpush1.msra.mxu0 %v52
  %153 = vmatprep.subr.mxu0 0.0
  %154 = vmatpush1.msra.mxu0 %v53
  %155 = vmatprep.subr.mxu0 0.0
  %156 = vmatpush1.msra.mxu0 %v54
  %157 = vmatprep.subr.mxu0 0.0
  %158 = vmatpush1.msra.mxu0 %v55
  %159 = vmatprep.subr.mxu0 0.0
  %160 = vmatpush1.msra.mxu0 %v56
  %161 = vmatprep.subr.mxu0 0.0
  %162 = vmatpush1.msra.mxu0 %v57
  %163 = vmatprep.mubr.f32.mxu0 %v15
  %164 = vmatmul.mubr.f32.gmra.mrb[0].mxu0 %v14
  %v165 = vpop.f32.mrb[0].mxu0
  %v166 = vadd.f32 %v86, %v165
  %v167 = vpop.f32.mrb[0].mxu0
  %168 = vmatprep.mubr.f32.mxu0 %v19
  %169 = vmatmul.mubr.f32.gmra.mrb[0].mxu0 %v18
  %v170 = vpop.f32.mrb[0].mxu0
  %v171 = vadd.f32 %v87, %v170
  %v172 = vpop.f32.mrb[0].mxu0
  %173 = vmatprep.mubr.f32.mxu0 %v23
  %174 = vmatmul.mubr.f32.gmra.mrb[0].mxu0 %v22
  %v175 = vpop.f32.mrb[0].mxu0
  %v176 = vadd.f32 %v88, %v175
  %v177 = vpop.f32.mrb[0].mxu0
  %178 = vdwg.mxu0
  %179 = vmatprep.subr.mxu0 0.0
  %180 = vmatpush1.msra.mxu0 %v58
  %181 = vmatprep.subr.mxu0 0.0
  %182 = vmatpush1.msra.mxu0 %v59
  %183 = vmatprep.subr.mxu0 0.0
  %184 = vmatpush1.msra.mxu0 %v60
  %185 = vmatprep.subr.mxu0 0.0
  %186 = vmatpush1.msra.mxu0 %v61
  %187 = vmatprep.subr.mxu0 0.0
  %188 = vmatpush1.msra.mxu0 %v62
  %189 = vmatprep.subr.mxu0 0.0
  %190 = vmatpush1.msra.mxu0 %v63
  %191 = vmatprep.subr.mxu0 0.0
  %192 = vmatpush1.msra.mxu0 %v64
  %193 = vmatprep.subr.mxu0 0.0
  %194 = vmatpush1.msra.mxu0 %v65
  %195 = vmatprep.subr.mxu0 0.0
  %196 = vmatpush1.msra.mxu0 %v66
  %197 = vmatprep.subr.mxu0 0.0
  %198 = vmatpush1.msra.mxu0 %v67
  %199 = vmatprep.subr.mxu0 0.0
  %200 = vmatpush1.msra.mxu0 %v68
  %201 = vmatprep.subr.mxu0 0.0
  %202 = vmatpush1.msra.mxu0 %v69
  %203 = vmatprep.subr.mxu0 0.0
  %204 = vmatpush1.msra.mxu0 %v70
  %205 = vmatprep.subr.mxu0 0.0
  %206 = vmatpush1.msra.mxu0 %v71
  %207 = vmatprep.subr.mxu0 0.0
  %208 = vmatpush1.msra.mxu0 %v72
  %209 = vmatprep.subr.mxu0 0.0
  %210 = vmatpush1.msra.mxu0 %v73
  %211 = vmatprep.subr.mxu0 0.0
  %212 = vmatpush1.msra.mxu0 %v74
  %213 = vmatprep.subr.mxu0 0.0
  %214 = vmatpush1.msra.mxu0 %v75
  %215 = vmatprep.subr.mxu0 0.0
  %216 = vmatpush1.msra.mxu0 %v76
  %217 = vmatprep.subr.mxu0 0.0
  %218 = vmatpush1.msra.mxu0 %v77
  %219 = vmatprep.subr.mxu0 0.0
  %220 = vmatpush1.msra.mxu0 %v78
  %221 = vmatprep.subr.mxu0 0.0
  %222 = vmatpush1.msra.mxu0 %v79
  %223 = vmatprep.subr.mxu0 0.0
  %224 = vmatpush1.msra.mxu0 %v80
  %225 = vmatprep.subr.mxu0 0.0
  %226 = vmatpush1.msra.mxu0 %v81
  %227 = vmatprep.subr.mxu0 0.0
  %228 = vmatpush1.msra.mxu0 %v82
  %229 = vmatprep.subr.mxu0 0.0
  %230 = vmatpush1.msra.mxu0 %v83
  %231 = vmatprep.subr.mxu0 0.0
  %232 = vmatpush1.msra.mxu0 %v84
  %233 = vmatprep.subr.mxu0 0.0
  %234 = vmatpush1.msra.mxu0 %v85
  %235 = vmatprep.subr.mxu0 0.0
  %236 = vmatpush1.msra.mxu0 0.0
  %237 = vmatprep.subr.mxu0 0.0
  %238 = vmatpush1.msra.mxu0 0.0
  %239 = vmatprep.subr.mxu0 0.0
  %240 = vmatpush1.msra.mxu0 0.0
  %241 = vmatprep.subr.mxu0 0.0
  %242 = vmatpush1.msra.mxu0 0.0
  %243 = vmatprep.mubr.f32.mxu0 %v91
  %244 = vmatmul.mubr.f32.gmra.mrb[0].mxu0 %v16
  %v245 = vpop.f32.mrb[0].mxu0
  %v246 = vadd.f32 %v166, %v245
  %v247 = vpop.f32.mrb[0].mxu0
  %248 = vmatprep.mubr.f32.mxu0 %v94
  %249 = vmatmul.mubr.f32.gmra.mrb[0].mxu0 %v20
  %v250 = vpop.f32.mrb[0].mxu0
  %v251 = vadd.f32 %v171, %v250
  %v252 = vpop.f32.mrb[0].mxu0
  %253 = vmatprep.mubr.f32.mxu0 %v97
  %254 = vmatmul.mubr.f32.gmra.mrb[0].mxu0 %v24
  %v255 = vpop.f32.mrb[0].mxu0
  %v256 = vadd.f32 %v176, %v255
  %v257 = vpop.f32.mrb[0].mxu0
  %258 = vdwg.mxu0
  %vm259 = vcmask 7168
  %260 = vst.msk [vmem:[%s3] sm:$0xff] %vm259, %v246
  %261 = vst.msk [vmem:[%s3 + $0x8] sm:$0xff] %vm259, %v251
  %vm262 = vcmask 3072
  %263 = vst.msk [vmem:[%s3 + $0x10] sm:$0xf] %vm262, %v256
  // Predicated region
  $region14: #{tpu_custom_call.1} parent=0 // pred_check
    _
  $region15: #{tpu_custom_call.1} parent=0 // pred_check_branch
    %265 = sbr.rel (0) target = $region17
  $region16: #{tpu_custom_call.1} parent=0 // pred_region
    _
  $region17: #{tpu_custom_call.1} parent=0 // pred_fallthru
    _
  // Predicated region
  $region18: #{tpu_custom_call.1} parent=0 // pred_check
    _
  $region19: #{tpu_custom_call.1} parent=0 // pred_check_branch
    %267 = sbr.rel (0) target = $region21
  $region20: #{tpu_custom_call.1} parent=0 // pred_region
    _
  $region21: #{tpu_custom_call.1} parent=0 // pred_fallthru
    _

</llo_original>
